<compile_context>
chip_gen: v5e
topology: v5e:2x2
jax: 0.10.0
libtpu: 0.0.40
codegen_flags: <defaults>
</compile_context>

<pallas_src>
import jax
import jax.numpy as jnp
from jax.experimental import pallas as pl
from jax.experimental.pallas import tpu as pltpu

CONV_OUT = 80              # conv1 output channels (fixed by the module)
KH = KW = 3                # conv1 kernel size
POOL_HW = 3                # pooled spatial size: patch 9 -> conv 7 -> floor-pool 3
N_POS = POOL_HW * POOL_HW  # 9 pooled positions
N_SUB = 4                  # 2x2 max-pool window
N_ROWS = N_SUB * N_POS     # 36 pre-pool conv positions actually needed
LANE = 128


def _round_up(x, m):
    return (x + m - 1) // m * m


def _im2col_pooled_patches(x):
    """(N, 9, 9, C) -> (36, N, 9*C).

    Leading index r = sub * 9 + (i * 3 + j) with sub = di * 2 + dj enumerating the
    2x2 pool window and (i, j) the pooled position; features ordered (kh, kw, c).
    Conv rows/cols dropped by floor pooling are never materialized.  Pure glue.
    """
    n, _, _, c = x.shape
    rows = []
    for di in range(2):
        for dj in range(2):
            for i in range(POOL_HW):
                for j in range(POOL_HW):
                    oh = 2 * i + di
                    ow = 2 * j + dj
                    rows.append(
                        x[:, oh:oh + KH, ow:ow + KW, :].reshape(n, KH * KW * c))
    return jnp.stack(rows, axis=0)


def _cnn2d_kernel(p_ref, wc_ref, bc_ref, wf_ref, bf_ref, o_ref):
    # p_ref : (36, Bt, 9C)   wc_ref: (9C, 80)    bc_ref: (1, 80)
    # wf_ref: (720, NCP)     bf_ref: (1, NCP)    o_ref : (Bt, NCP)
    _, bt, feat_in = p_ref.shape
    ncp = o_ref.shape[1]
    wc = wc_ref[...]                                                 # (9C, 80)

    # Conv as 4 MXU matmuls (one per 2x2 pool sub-position) with the max-pool folded
    # into the loop: keeps the peak intermediate at (9*Bt, 80) instead of (36*Bt, 80).
    pooled = None
    for s in range(N_SUB):
        ps = p_ref[s * N_POS:(s + 1) * N_POS].reshape(N_POS * bt, feat_in)
        cs = jnp.dot(ps, wc, preferred_element_type=jnp.float32)    # (9*Bt, 80)
        pooled = cs if pooled is None else jnp.maximum(pooled, cs)

    # Per-channel conv bias commutes with max-pool: add once after pooling, then ReLU
    # (ReLU-after-pool matches the PyTorch forward).
    act = jnp.maximum(pooled + bc_ref[...], 0.0)                     # (9*Bt, 80)

    # fc_enc: 9 batched (Bt, 80) x (80, NCP) matmuls; accumulator seeded with bias.
    acc = jnp.broadcast_to(bf_ref[...], (bt, ncp))
    for p in range(N_POS):
        acc = acc + jnp.dot(act[p * bt:(p + 1) * bt, :],
                            wf_ref[p * CONV_OUT:(p + 1) * CONV_OUT, :],
                            preferred_element_type=jnp.float32)
    o_ref[...] = acc                                                 # lane-dense store


def cnn2d_forward(x, w_conv, b_conv, w_fc, b_fc, *, batch_tile=512):
    """x: (N, 9, 9, C_in) float32; returns (N, n_classes) float32."""
    n, _, _, c = x.shape
    n_classes = w_fc.shape[0]
    feat = CONV_OUT * N_POS          # 720
    feat_in = KH * KW * c            # 9*C
    ncp = _round_up(n_classes, LANE)  # lane-pad classes to a multiple of 128

    bt = min(batch_tile, _round_up(max(n, 1), 8))
    n_pad = _round_up(n, bt)
    n_tiles = n_pad // bt

    patches = _im2col_pooled_patches(x)                              # (36, N, 9C)
    if n_pad != n:
        patches = jnp.pad(patches, ((0, 0), (0, n_pad - n), (0, 0)))

    # conv weight OIHW -> (kh, kw, c_in, 80) flattened to (9C, 80)
    wc_k = jnp.transpose(w_conv, (2, 3, 1, 0)).reshape(feat_in, CONV_OUT)
    bc_k = b_conv.reshape(1, CONV_OUT)
    # PyTorch flatten order for the fc input is (channel, ph, pw); kernel row index is
    # (ph*3 + pw)*80 + channel, so permute the fc weight; zero-pad classes to NCP.
    wf_k = jnp.transpose(w_fc.reshape(n_classes, CONV_OUT, POOL_HW, POOL_HW),
                         (2, 3, 1, 0)).reshape(feat, n_classes)
    wf_k = jnp.pad(wf_k, ((0, 0), (0, ncp - n_classes)))
    bf_k = jnp.pad(b_fc.reshape(1, n_classes), ((0, 0), (0, ncp - n_classes)))

    out = pl.pallas_call(
        _cnn2d_kernel,
        out_shape=jax.ShapeDtypeStruct((n_pad, ncp), jnp.float32),
        grid=(n_tiles,),
        in_specs=[
            pl.BlockSpec((N_ROWS, bt, feat_in), lambda g: (0, g, 0)),
            pl.BlockSpec((feat_in, CONV_OUT), lambda g: (0, 0)),
            pl.BlockSpec((1, CONV_OUT), lambda g: (0, 0)),
            pl.BlockSpec((feat, ncp), lambda g: (0, 0)),
            pl.BlockSpec((1, ncp), lambda g: (0, 0)),
        ],
        out_specs=pl.BlockSpec((bt, ncp), lambda g: (g, 0)),
        compiler_params=pltpu.CompilerParams(
            dimension_semantics=("parallel",),          # megacore splits batch tiles
            vmem_limit_bytes=48 * 1024 * 1024,          # Bt=512: ~30 MB incl. 2x-buf
        ),
    )(patches, wc_k, bc_k, wf_k, bf_k)
    return out[:n, :n_classes]


def cnn2d_reference(x, w_conv, b_conv, w_fc, b_fc):
    """Pure-JAX reference reproducing the PyTorch forward exactly."""
    x_nchw = jnp.transpose(x, (0, 3, 1, 2))
    conv = jax.lax.conv_general_dilated(
        x_nchw, w_conv, window_strides=(1, 1), padding="VALID",
        dimension_numbers=("NCHW", "OIHW", "NCHW"))
    conv = conv + b_conv.reshape(1, -1, 1, 1)
    pooled = jax.lax.reduce_window(conv, -jnp.inf, jax.lax.max,
                                   (1, 1, 2, 2), (1, 1, 2, 2), "VALID")
    act = jnp.maximum(pooled, 0.0)
    flat = act.reshape(x.shape[0], -1)
    return flat @ w_fc.T + b_fc


if __name__ == "__main__":
    batch, c_in, n_classes, patch = 2, 4, 10, 9
    feat = CONV_OUT * N_POS  # 720

    key = jax.random.PRNGKey(0)
    kx, kwc, kwf = jax.random.split(key, 3)

    # deterministic parameter init mirroring kaiming_normal_ (fan_in, gain=sqrt(2))
    x = jax.random.normal(kx, (batch, patch, patch, c_in), jnp.float32)
    w_conv = jax.random.normal(kwc, (CONV_OUT, c_in, KH, KW), jnp.float32) \
        * jnp.sqrt(2.0 / (c_in * KH * KW))
    b_conv = jnp.zeros((CONV_OUT,), jnp.float32)
    w_fc = jax.random.normal(kwf, (n_classes, feat), jnp.float32) * jnp.sqrt(2.0 / feat)
    b_fc = jnp.zeros((n_classes,), jnp.float32)

    out = jax.jit(cnn2d_forward)(x, w_conv, b_conv, w_fc, b_fc)
    out = jax.block_until_ready(out)

    ref = cnn2d_reference(x, w_conv, b_conv, w_fc, b_fc)
    assert out.shape == (batch, n_classes)
    assert jnp.allclose(out, ref, atol=1e-4, rtol=1e-4), (out, ref)
    print("KERNEL_OK")
</pallas_src>

<mosaic_0001>
module attributes {stable_mosaic.version = 11 : i64} {
  func.func @_cnn2d_kernel(%arg0: i32, %arg1: memref<36x8x36xf32, #tpu.memory_space<vmem>>, %arg2: memref<36x80xf32, #tpu.memory_space<vmem>>, %arg3: memref<1x80xf32, #tpu.memory_space<vmem>>, %arg4: memref<720x128xf32, #tpu.memory_space<vmem>>, %arg5: memref<1x128xf32, #tpu.memory_space<vmem>>, %arg6: memref<8x128xf32, #tpu.memory_space<vmem>>) attributes {dimension_semantics = [#tpu.dimension_semantics<parallel>], iteration_bounds = array<i64: 1>, scalar_prefetch = 0 : i64, scratch_operands = 0 : i64, tpu.core_type = #tpu.core_type<tc>, window_params = [{transform_indices = @transform_0, window_bounds = array<i64: 36, 8, 36>}, {pipeline_mode = #tpu.pipeline_mode<synchronous>, transform_indices = @transform_1, window_bounds = array<i64: 36, 80>}, {pipeline_mode = #tpu.pipeline_mode<synchronous>, transform_indices = @transform_2, window_bounds = array<i64: 1, 80>}, {pipeline_mode = #tpu.pipeline_mode<synchronous>, transform_indices = @transform_3, window_bounds = array<i64: 720, 128>}, {pipeline_mode = #tpu.pipeline_mode<synchronous>, transform_indices = @transform_4, window_bounds = array<i64: 1, 128>}, {transform_indices = @transform_5, window_bounds = array<i64: 8, 128>}]} {
    %c0 = arith.constant 0 : index
    %c0_0 = arith.constant 0 : index
    %0 = vector.load %arg2[%c0, %c0_0] : memref<36x80xf32, #tpu.memory_space<vmem>>, vector<36x80xf32>
    %c0_1 = arith.constant 0 : index
    %c0_2 = arith.constant 0 : index
    %c0_3 = arith.constant 0 : index
    %1 = vector.load %arg1[%c0_1, %c0_2, %c0_3] : memref<36x8x36xf32, #tpu.memory_space<vmem>>, vector<9x8x36xf32>
    %2 = vector.shape_cast %1 : vector<9x8x36xf32> to vector<72x36xf32>
    %cst = arith.constant dense<0.000000e+00> : vector<72x80xf32>
    %3 = tpu.matmul %2, %0, %cst {dimension_numbers = #tpu.dot_dimension_numbers<[1], [0], [0], [1], [0, 0, 1, 1], [], []>} : vector<72x36xf32>, vector<36x80xf32>, vector<72x80xf32> -> vector<72x80xf32>
    %c9 = arith.constant 9 : index
    %c0_4 = arith.constant 0 : index
    %c0_5 = arith.constant 0 : index
    %4 = vector.load %arg1[%c9, %c0_4, %c0_5] : memref<36x8x36xf32, #tpu.memory_space<vmem>>, vector<9x8x36xf32>
    %5 = vector.shape_cast %4 : vector<9x8x36xf32> to vector<72x36xf32>
    %cst_6 = arith.constant dense<0.000000e+00> : vector<72x80xf32>
    %6 = tpu.matmul %5, %0, %cst_6 {dimension_numbers = #tpu.dot_dimension_numbers<[1], [0], [0], [1], [0, 0, 1, 1], [], []>} : vector<72x36xf32>, vector<36x80xf32>, vector<72x80xf32> -> vector<72x80xf32>
    %7 = arith.maximumf %3, %6 : vector<72x80xf32>
    %c18 = arith.constant 18 : index
    %c0_7 = arith.constant 0 : index
    %c0_8 = arith.constant 0 : index
    %8 = vector.load %arg1[%c18, %c0_7, %c0_8] : memref<36x8x36xf32, #tpu.memory_space<vmem>>, vector<9x8x36xf32>
    %9 = vector.shape_cast %8 : vector<9x8x36xf32> to vector<72x36xf32>
    %cst_9 = arith.constant dense<0.000000e+00> : vector<72x80xf32>
    %10 = tpu.matmul %9, %0, %cst_9 {dimension_numbers = #tpu.dot_dimension_numbers<[1], [0], [0], [1], [0, 0, 1, 1], [], []>} : vector<72x36xf32>, vector<36x80xf32>, vector<72x80xf32> -> vector<72x80xf32>
    %11 = arith.maximumf %7, %10 : vector<72x80xf32>
    %c27 = arith.constant 27 : index
    %c0_10 = arith.constant 0 : index
    %c0_11 = arith.constant 0 : index
    %12 = vector.load %arg1[%c27, %c0_10, %c0_11] : memref<36x8x36xf32, #tpu.memory_space<vmem>>, vector<9x8x36xf32>
    %13 = vector.shape_cast %12 : vector<9x8x36xf32> to vector<72x36xf32>
    %cst_12 = arith.constant dense<0.000000e+00> : vector<72x80xf32>
    %14 = tpu.matmul %13, %0, %cst_12 {dimension_numbers = #tpu.dot_dimension_numbers<[1], [0], [0], [1], [0, 0, 1, 1], [], []>} : vector<72x36xf32>, vector<36x80xf32>, vector<72x80xf32> -> vector<72x80xf32>
    %15 = arith.maximumf %11, %14 : vector<72x80xf32>
    %c0_13 = arith.constant 0 : index
    %c0_14 = arith.constant 0 : index
    %16 = vector.load %arg3[%c0_13, %c0_14] : memref<1x80xf32, #tpu.memory_space<vmem>>, vector<1x80xf32>
    %17 = vector.broadcast %16 : vector<1x80xf32> to vector<72x80xf32>
    %18 = arith.addf %15, %17 : vector<72x80xf32>
    %cst_15 = arith.constant 0.000000e+00 : f32
    %19 = vector.broadcast %cst_15 : f32 to vector<72x80xf32>
    %20 = arith.maximumf %18, %19 : vector<72x80xf32>
    %c0_16 = arith.constant 0 : index
    %c0_17 = arith.constant 0 : index
    %21 = vector.load %arg5[%c0_16, %c0_17] : memref<1x128xf32, #tpu.memory_space<vmem>>, vector<1x128xf32>
    %22 = vector.shape_cast %21 : vector<1x128xf32> to vector<1x128xf32>
    %23 = vector.broadcast %22 : vector<1x128xf32> to vector<8x128xf32>
    %24 = vector.extract_strided_slice %20 {offsets = [0, 0], sizes = [8, 80], strides = [1, 1]} : vector<72x80xf32> to vector<8x80xf32>
    %c0_18 = arith.constant 0 : index
    %c0_19 = arith.constant 0 : index
    %25 = vector.load %arg4[%c0_18, %c0_19] : memref<720x128xf32, #tpu.memory_space<vmem>>, vector<80x128xf32>
    %cst_20 = arith.constant dense<0.000000e+00> : vector<8x128xf32>
    %26 = tpu.matmul %24, %25, %cst_20 {dimension_numbers = #tpu.dot_dimension_numbers<[1], [0], [0], [1], [0, 0, 1, 1], [], []>} : vector<8x80xf32>, vector<80x128xf32>, vector<8x128xf32> -> vector<8x128xf32>
    %27 = arith.addf %23, %26 : vector<8x128xf32>
    %28 = vector.extract_strided_slice %20 {offsets = [8, 0], sizes = [8, 80], strides = [1, 1]} : vector<72x80xf32> to vector<8x80xf32>
    %c80 = arith.constant 80 : index
    %c0_21 = arith.constant 0 : index
    %29 = vector.load %arg4[%c80, %c0_21] : memref<720x128xf32, #tpu.memory_space<vmem>>, vector<80x128xf32>
    %cst_22 = arith.constant dense<0.000000e+00> : vector<8x128xf32>
    %30 = tpu.matmul %28, %29, %cst_22 {dimension_numbers = #tpu.dot_dimension_numbers<[1], [0], [0], [1], [0, 0, 1, 1], [], []>} : vector<8x80xf32>, vector<80x128xf32>, vector<8x128xf32> -> vector<8x128xf32>
    %31 = arith.addf %27, %30 : vector<8x128xf32>
    %32 = vector.extract_strided_slice %20 {offsets = [16, 0], sizes = [8, 80], strides = [1, 1]} : vector<72x80xf32> to vector<8x80xf32>
    %c160 = arith.constant 160 : index
    %c0_23 = arith.constant 0 : index
    %33 = vector.load %arg4[%c160, %c0_23] : memref<720x128xf32, #tpu.memory_space<vmem>>, vector<80x128xf32>
    %cst_24 = arith.constant dense<0.000000e+00> : vector<8x128xf32>
    %34 = tpu.matmul %32, %33, %cst_24 {dimension_numbers = #tpu.dot_dimension_numbers<[1], [0], [0], [1], [0, 0, 1, 1], [], []>} : vector<8x80xf32>, vector<80x128xf32>, vector<8x128xf32> -> vector<8x128xf32>
    %35 = arith.addf %31, %34 : vector<8x128xf32>
    %36 = vector.extract_strided_slice %20 {offsets = [24, 0], sizes = [8, 80], strides = [1, 1]} : vector<72x80xf32> to vector<8x80xf32>
    %c240 = arith.constant 240 : index
    %c0_25 = arith.constant 0 : index
    %37 = vector.load %arg4[%c240, %c0_25] : memref<720x128xf32, #tpu.memory_space<vmem>>, vector<80x128xf32>
    %cst_26 = arith.constant dense<0.000000e+00> : vector<8x128xf32>
    %38 = tpu.matmul %36, %37, %cst_26 {dimension_numbers = #tpu.dot_dimension_numbers<[1], [0], [0], [1], [0, 0, 1, 1], [], []>} : vector<8x80xf32>, vector<80x128xf32>, vector<8x128xf32> -> vector<8x128xf32>
    %39 = arith.addf %35, %38 : vector<8x128xf32>
    %40 = vector.extract_strided_slice %20 {offsets = [32, 0], sizes = [8, 80], strides = [1, 1]} : vector<72x80xf32> to vector<8x80xf32>
    %c320 = arith.constant 320 : index
    %c0_27 = arith.constant 0 : index
    %41 = vector.load %arg4[%c320, %c0_27] : memref<720x128xf32, #tpu.memory_space<vmem>>, vector<80x128xf32>
    %cst_28 = arith.constant dense<0.000000e+00> : vector<8x128xf32>
    %42 = tpu.matmul %40, %41, %cst_28 {dimension_numbers = #tpu.dot_dimension_numbers<[1], [0], [0], [1], [0, 0, 1, 1], [], []>} : vector<8x80xf32>, vector<80x128xf32>, vector<8x128xf32> -> vector<8x128xf32>
    %43 = arith.addf %39, %42 : vector<8x128xf32>
    %44 = vector.extract_strided_slice %20 {offsets = [40, 0], sizes = [8, 80], strides = [1, 1]} : vector<72x80xf32> to vector<8x80xf32>
    %c400 = arith.constant 400 : index
    %c0_29 = arith.constant 0 : index
    %45 = vector.load %arg4[%c400, %c0_29] : memref<720x128xf32, #tpu.memory_space<vmem>>, vector<80x128xf32>
    %cst_30 = arith.constant dense<0.000000e+00> : vector<8x128xf32>
    %46 = tpu.matmul %44, %45, %cst_30 {dimension_numbers = #tpu.dot_dimension_numbers<[1], [0], [0], [1], [0, 0, 1, 1], [], []>} : vector<8x80xf32>, vector<80x128xf32>, vector<8x128xf32> -> vector<8x128xf32>
    %47 = arith.addf %43, %46 : vector<8x128xf32>
    %48 = vector.extract_strided_slice %20 {offsets = [48, 0], sizes = [8, 80], strides = [1, 1]} : vector<72x80xf32> to vector<8x80xf32>
    %c480 = arith.constant 480 : index
    %c0_31 = arith.constant 0 : index
    %49 = vector.load %arg4[%c480, %c0_31] : memref<720x128xf32, #tpu.memory_space<vmem>>, vector<80x128xf32>
    %cst_32 = arith.constant dense<0.000000e+00> : vector<8x128xf32>
    %50 = tpu.matmul %48, %49, %cst_32 {dimension_numbers = #tpu.dot_dimension_numbers<[1], [0], [0], [1], [0, 0, 1, 1], [], []>} : vector<8x80xf32>, vector<80x128xf32>, vector<8x128xf32> -> vector<8x128xf32>
    %51 = arith.addf %47, %50 : vector<8x128xf32>
    %52 = vector.extract_strided_slice %20 {offsets = [56, 0], sizes = [8, 80], strides = [1, 1]} : vector<72x80xf32> to vector<8x80xf32>
    %c560 = arith.constant 560 : index
    %c0_33 = arith.constant 0 : index
    %53 = vector.load %arg4[%c560, %c0_33] : memref<720x128xf32, #tpu.memory_space<vmem>>, vector<80x128xf32>
    %cst_34 = arith.constant dense<0.000000e+00> : vector<8x128xf32>
    %54 = tpu.matmul %52, %53, %cst_34 {dimension_numbers = #tpu.dot_dimension_numbers<[1], [0], [0], [1], [0, 0, 1, 1], [], []>} : vector<8x80xf32>, vector<80x128xf32>, vector<8x128xf32> -> vector<8x128xf32>
    %55 = arith.addf %51, %54 : vector<8x128xf32>
    %56 = vector.extract_strided_slice %20 {offsets = [64, 0], sizes = [8, 80], strides = [1, 1]} : vector<72x80xf32> to vector<8x80xf32>
    %c640 = arith.constant 640 : index
    %c0_35 = arith.constant 0 : index
    %57 = vector.load %arg4[%c640, %c0_35] : memref<720x128xf32, #tpu.memory_space<vmem>>, vector<80x128xf32>
    %cst_36 = arith.constant dense<0.000000e+00> : vector<8x128xf32>
    %58 = tpu.matmul %56, %57, %cst_36 {dimension_numbers = #tpu.dot_dimension_numbers<[1], [0], [0], [1], [0, 0, 1, 1], [], []>} : vector<8x80xf32>, vector<80x128xf32>, vector<8x128xf32> -> vector<8x128xf32>
    %59 = arith.addf %55, %58 : vector<8x128xf32>
    %c0_37 = arith.constant 0 : index
    %c0_38 = arith.constant 0 : index
    %60 = vector.load %arg6[%c0_37, %c0_38] : memref<8x128xf32, #tpu.memory_space<vmem>>, vector<8x128xf32>
    tpu.vector_store %arg6[%c0_37, %c0_38], %59 {strides = array<i32>} : memref<8x128xf32, #tpu.memory_space<vmem>>, vector<8x128xf32>,
    return
  }
  func.func @transform_0(%arg0: i32) -> (i32, i32, i32) {
    %c0_i32 = arith.constant 0 : i32
    %c0_i32_0 = arith.constant 0 : i32
    %c0_i32_1 = arith.constant 0 : i32
    return %c0_i32, %arg0, %c0_i32_0 : i32, i32, i32
  }
  func.func @transform_1(%arg0: i32) -> (i32, i32) {
    %c0_i32 = arith.constant 0 : i32
    %c0_i32_0 = arith.constant 0 : i32
    %c0_i32_1 = arith.constant 0 : i32
    return %c0_i32, %c0_i32_0 : i32, i32
  }
  func.func @transform_2(%arg0: i32) -> (i32, i32) {
    %c0_i32 = arith.constant 0 : i32
    %c0_i32_0 = arith.constant 0 : i32
    %c0_i32_1 = arith.constant 0 : i32
    return %c0_i32, %c0_i32_0 : i32, i32
  }
  func.func @transform_3(%arg0: i32) -> (i32, i32) {
    %c0_i32 = arith.constant 0 : i32
    %c0_i32_0 = arith.constant 0 : i32
    %c0_i32_1 = arith.constant 0 : i32
    return %c0_i32, %c0_i32_0 : i32, i32
  }
  func.func @transform_4(%arg0: i32) -> (i32, i32) {
    %c0_i32 = arith.constant 0 : i32
    %c0_i32_0 = arith.constant 0 : i32
    %c0_i32_1 = arith.constant 0 : i32
    return %c0_i32, %c0_i32_0 : i32, i32
  }
  func.func @transform_5(%arg0: i32) -> (i32, i32) {
    %c0_i32 = arith.constant 0 : i32
    %c0_i32_0 = arith.constant 0 : i32
    return %arg0, %c0_i32 : i32, i32
  }
}

</mosaic_0001>

<llo_original>
// kernel: cnn2d_forward.1
$region0: #{cnn2d_forward.1}
  #allocation0 [shape = 'u32[]', space=smem, size = 0x4, offset = 0x4, fixed_abs, tag = 'smem constant byte address 0x4 - core index']
  #allocation1 [shape = 'u32[72,128]{1,0:T(1,128)}', space=vmem, size = 0x9000, scoped, tag = 'internal scratch']
  %s0 = inlined_call_operand.vmem [shape: f32[36,8,36], index: 0, kind: input, shape index: {}]
  %s1 = inlined_call_operand.vmem [shape: f32[36,80], index: 1, kind: input, shape index: {}]
  %s2 = inlined_call_operand.vmem [shape: f32[1,80], index: 2, kind: input, shape index: {}]
  %s3 = inlined_call_operand.vmem [shape: f32[720,128], index: 3, kind: input, shape index: {}]
  %s4 = inlined_call_operand.vmem [shape: f32[1,128], index: 4, kind: input, shape index: {}]
  %s5 = inlined_call_operand.vmem [shape: f32[8,128], index: 5, kind: output, shape index: {}]
  %s6 = sld [smem:[#allocation0]]
  $region30: #{cnn2d_forward.1} parent=0
    _
  %s8 = ssub.s32 1, %s6
  %s9 = scalar_select 0, %s8, %s6
  // Predicated region
  $region2: #{cnn2d_forward.1} parent=0 // pred_check
    _
  $region3: #{cnn2d_forward.1} parent=0 // pred_check_branch
    %11 = sbr.rel (0) target = $region5
  $region4: #{cnn2d_forward.1} parent=0 // pred_region
    _
  $region5: #{cnn2d_forward.1} parent=0 // pred_fallthru
    _
  // Predicated region
  $region6: #{cnn2d_forward.1} parent=0 // pred_check
    _
  $region7: #{cnn2d_forward.1} parent=0 // pred_check_branch
    %13 = sbr.rel (0) target = $region9
  $region8: #{cnn2d_forward.1} parent=0 // pred_region
    _
  $region9: #{cnn2d_forward.1} parent=0 // pred_fallthru
    _
  // Predicated region
  $region10: #{cnn2d_forward.1} parent=0 // pred_check
    _
  $region11: #{cnn2d_forward.1} parent=0 // pred_check_branch
    %15 = sbr.rel (0) target = $region13
  $region12: #{cnn2d_forward.1} parent=0 // pred_region
    _
  $region13: #{cnn2d_forward.1} parent=0 // pred_fallthru
    _
  // Predicated region
  $region14: #{cnn2d_forward.1} parent=0 // pred_check
    _
  $region15: #{cnn2d_forward.1} parent=0 // pred_check_branch
    %17 = sbr.rel (0) target = $region17
  $region16: #{cnn2d_forward.1} parent=0 // pred_region
    _
  $region17: #{cnn2d_forward.1} parent=0 // pred_fallthru
    _
  // Predicated region
  $region18: #{cnn2d_forward.1} parent=0 // pred_check
    _
  $region19: #{cnn2d_forward.1} parent=0 // pred_check_branch
    %19 = sbr.rel (0) target = $region21
  $region20: #{cnn2d_forward.1} parent=0 // pred_region
    _
  $region21: #{cnn2d_forward.1} parent=0 // pred_fallthru
    _
  %v20 = vld [vmem:[%s1] sm:$0xff]
  %v21 = vld [vmem:[%s1 + $0x8] sm:$0xff]
  %v22 = vld [vmem:[%s1 + $0x10] sm:$0xff]
  %v23 = vld [vmem:[%s1 + $0x18] sm:$0xff]
  %v24 = vld [vmem:[%s1 + $0x20] sm:$0xf]
  %v25 = vld [vmem:[%s0] sm:$0xff]
  %v26 = vld [vmem:[%s0 + $0x8] sm:$0xff]
  %v27 = vld [vmem:[%s0 + $0x10] sm:$0xff]
  %v28 = vld [vmem:[%s0 + $0x18] sm:$0xff]
  %v29 = vld [vmem:[%s0 + $0x20] sm:$0xff]
  %v30 = vld [vmem:[%s0 + $0x28] sm:$0xff]
  %v31 = vld [vmem:[%s0 + $0x30] sm:$0xff]
  %v32 = vld [vmem:[%s0 + $0x38] sm:$0xff]
  %v33 = vld [vmem:[%s0 + $0x40] sm:$0xff]
  %vm34 = vcmask 293888
  %v36 = vsel %vm34, %v25, 0
  %v39 = vsel %vm34, %v26, 0
  %v42 = vsel %vm34, %v27, 0
  %v45 = vsel %vm34, %v28, 0
  %v48 = vsel %vm34, %v29, 0
  %v51 = vsel %vm34, %v30, 0
  %v54 = vsel %vm34, %v31, 0
  %v57 = vsel %vm34, %v32, 0
  %v60 = vsel %vm34, %v33, 0
  %vm62 = vcmask 1043456
  %v64 = vsel %vm62, %v24, 0
  %66 = vmatpush.msra.mxu0 0.0
  %67 = vmatpush.msra.mxu0 0.0
  %68 = vmatpush.msra.mxu0 0.0
  %69 = vmatpush.msra.mxu0 0.0
  %70 = vmatpush.msra.mxu0 0.0
  %71 = vmatpush.msra.mxu0 0.0
  %72 = vmatpush.msra.mxu0 0.0
  %73 = vmatpush.msra.mxu0 0.0
  %74 = vmatpush.msra.mxu0 0.0
  %75 = vmatpush.msra.mxu0 0.0
  %76 = vmatpush.msra.mxu0 0.0
  %77 = vmatpush.msra.mxu0 %v64
  %78 = vmatpush.msra.mxu0 %v23
  %79 = vmatpush.msra.mxu0 %v22
  %80 = vmatpush.msra.mxu0 %v21
  %81 = vmatpush.msra.mxu0 %v20
  %82 = vmatmul.f32.gmra.mxu0 %v36
  %v83 = vpop.f32.mrf.mxu0
  %v84 = vadd.f32 0.0, %v83
  %85 = vmatmul.f32.gmra.mxu0 %v39
  %v86 = vpop.f32.mrf.mxu0
  %v87 = vadd.f32 0.0, %v86
  %88 = vmatmul.f32.gmra.mxu0 %v42
  %v89 = vpop.f32.mrf.mxu0
  %v90 = vadd.f32 0.0, %v89
  %91 = vmatmul.f32.gmra.mxu0 %v45
  %v92 = vpop.f32.mrf.mxu0
  %v93 = vadd.f32 0.0, %v92
  %94 = vmatmul.f32.gmra.mxu0 %v48
  %v95 = vpop.f32.mrf.mxu0
  %v96 = vadd.f32 0.0, %v95
  %97 = vmatmul.f32.gmra.mxu0 %v51
  %v98 = vpop.f32.mrf.mxu0
  %v99 = vadd.f32 0.0, %v98
  %100 = vmatmul.f32.gmra.mxu0 %v54
  %v101 = vpop.f32.mrf.mxu0
  %v102 = vadd.f32 0.0, %v101
  %103 = vmatmul.f32.gmra.mxu0 %v57
  %v104 = vpop.f32.mrf.mxu0
  %v105 = vadd.f32 0.0, %v104
  %106 = vmatmul.f32.gmra.mxu0 %v60
  %v107 = vpop.f32.mrf.mxu0
  %v108 = vadd.f32 0.0, %v107
  %109 = vdwg.mxu0
  %s110 = scalar_lea.vmem %s0, 72
  %v111 = vld [vmem:[%s110] sm:$0xff]
  %v112 = vld [vmem:[%s110 + $0x8] sm:$0xff]
  %v113 = vld [vmem:[%s110 + $0x10] sm:$0xff]
  %v114 = vld [vmem:[%s110 + $0x18] sm:$0xff]
  %v115 = vld [vmem:[%s110 + $0x20] sm:$0xff]
  %v116 = vld [vmem:[%s110 + $0x28] sm:$0xff]
  %v117 = vld [vmem:[%s110 + $0x30] sm:$0xff]
  %v118 = vld [vmem:[%s110 + $0x38] sm:$0xff]
  %v119 = vld [vmem:[%s110 + $0x40] sm:$0xff]
  %v121 = vsel %vm34, %v111, 0
  %v124 = vsel %vm34, %v112, 0
  %v127 = vsel %vm34, %v113, 0
  %v130 = vsel %vm34, %v114, 0
  %v133 = vsel %vm34, %v115, 0
  %v136 = vsel %vm34, %v116, 0
  %v139 = vsel %vm34, %v117, 0
  %v142 = vsel %vm34, %v118, 0
  %v145 = vsel %vm34, %v119, 0
  %147 = vmatpush.msra.mxu0 0.0
  %148 = vmatpush.msra.mxu0 0.0
  %149 = vmatpush.msra.mxu0 0.0
  %150 = vmatpush.msra.mxu0 0.0
  %151 = vmatpush.msra.mxu0 0.0
  %152 = vmatpush.msra.mxu0 0.0
  %153 = vmatpush.msra.mxu0 0.0
  %154 = vmatpush.msra.mxu0 0.0
  %155 = vmatpush.msra.mxu0 0.0
  %156 = vmatpush.msra.mxu0 0.0
  %157 = vmatpush.msra.mxu0 0.0
  %158 = vmatpush.msra.mxu0 %v64
  %159 = vmatpush.msra.mxu0 %v23
  %160 = vmatpush.msra.mxu0 %v22
  %161 = vmatpush.msra.mxu0 %v21
  %162 = vmatpush.msra.mxu0 %v20
  %163 = vmatmul.f32.gmra.mxu0 %v121
  %v164 = vpop.f32.mrf.mxu0
  %v165 = vadd.f32 0.0, %v164
  %166 = vmatmul.f32.gmra.mxu0 %v124
  %v167 = vpop.f32.mrf.mxu0
  %v168 = vadd.f32 0.0, %v167
  %169 = vmatmul.f32.gmra.mxu0 %v127
  %v170 = vpop.f32.mrf.mxu0
  %v171 = vadd.f32 0.0, %v170
  %172 = vmatmul.f32.gmra.mxu0 %v130
  %v173 = vpop.f32.mrf.mxu0
  %v174 = vadd.f32 0.0, %v173
  %175 = vmatmul.f32.gmra.mxu0 %v133
  %v176 = vpop.f32.mrf.mxu0
  %v177 = vadd.f32 0.0, %v176
  %178 = vmatmul.f32.gmra.mxu0 %v136
  %v179 = vpop.f32.mrf.mxu0
  %v180 = vadd.f32 0.0, %v179
  %181 = vmatmul.f32.gmra.mxu0 %v139
  %v182 = vpop.f32.mrf.mxu0
  %v183 = vadd.f32 0.0, %v182
  %184 = vmatmul.f32.gmra.mxu0 %v142
  %v185 = vpop.f32.mrf.mxu0
  %v186 = vadd.f32 0.0, %v185
  %187 = vmatmul.f32.gmra.mxu0 %v145
  %v188 = vpop.f32.mrf.mxu0
  %v189 = vadd.f32 0.0, %v188
  %190 = vdwg.mxu0
  %v191 = vmax.f32 %v84, %v165
  %v192 = vmax.f32 %v87, %v168
  %v193 = vmax.f32 %v90, %v171
  %v194 = vmax.f32 %v93, %v174
  %v195 = vmax.f32 %v96, %v177
  %v196 = vmax.f32 %v99, %v180
  %v197 = vmax.f32 %v102, %v183
  %v198 = vmax.f32 %v105, %v186
  %v199 = vmax.f32 %v108, %v189
  %s200 = scalar_lea.vmem %s0, 144
  %v201 = vld [vmem:[%s200] sm:$0xff]
  %v202 = vld [vmem:[%s200 + $0x8] sm:$0xff]
  %v203 = vld [vmem:[%s200 + $0x10] sm:$0xff]
  %v204 = vld [vmem:[%s200 + $0x18] sm:$0xff]
  %v205 = vld [vmem:[%s200 + $0x20] sm:$0xff]
  %v206 = vld [vmem:[%s200 + $0x28] sm:$0xff]
  %v207 = vld [vmem:[%s200 + $0x30] sm:$0xff]
  %v208 = vld [vmem:[%s200 + $0x38] sm:$0xff]
  %v209 = vld [vmem:[%s200 + $0x40] sm:$0xff]
  %v211 = vsel %vm34, %v201, 0
  %v214 = vsel %vm34, %v202, 0
  %v217 = vsel %vm34, %v203, 0
  %v220 = vsel %vm34, %v204, 0
  %v223 = vsel %vm34, %v205, 0
  %v226 = vsel %vm34, %v206, 0
  %v229 = vsel %vm34, %v207, 0
  %v232 = vsel %vm34, %v208, 0
  %v235 = vsel %vm34, %v209, 0
  %237 = vmatpush.msra.mxu0 0.0
  %238 = vmatpush.msra.mxu0 0.0
  %239 = vmatpush.msra.mxu0 0.0
  %240 = vmatpush.msra.mxu0 0.0
  %241 = vmatpush.msra.mxu0 0.0
  %242 = vmatpush.msra.mxu0 0.0
  %243 = vmatpush.msra.mxu0 0.0
  %244 = vmatpush.msra.mxu0 0.0
  %245 = vmatpush.msra.mxu0 0.0
  %246 = vmatpush.msra.mxu0 0.0
  %247 = vmatpush.msra.mxu0 0.0
  %248 = vmatpush.msra.mxu0 %v64
  %249 = vmatpush.msra.mxu0 %v23
  %250 = vmatpush.msra.mxu0 %v22
  %251 = vmatpush.msra.mxu0 %v21
  %252 = vmatpush.msra.mxu0 %v20
  %253 = vmatmul.f32.gmra.mxu0 %v211
  %v254 = vpop.f32.mrf.mxu0
  %v255 = vadd.f32 0.0, %v254
  %256 = vmatmul.f32.gmra.mxu0 %v214
  %v257 = vpop.f32.mrf.mxu0
  %v258 = vadd.f32 0.0, %v257
  %259 = vmatmul.f32.gmra.mxu0 %v217
  %v260 = vpop.f32.mrf.mxu0
  %v261 = vadd.f32 0.0, %v260
  %262 = vmatmul.f32.gmra.mxu0 %v220
  %v263 = vpop.f32.mrf.mxu0
  %v264 = vadd.f32 0.0, %v263
  %265 = vmatmul.f32.gmra.mxu0 %v223
  %v266 = vpop.f32.mrf.mxu0
  %v267 = vadd.f32 0.0, %v266
  %268 = vmatmul.f32.gmra.mxu0 %v226
  %v269 = vpop.f32.mrf.mxu0
  %v270 = vadd.f32 0.0, %v269
  %271 = vmatmul.f32.gmra.mxu0 %v229
  %v272 = vpop.f32.mrf.mxu0
  %v273 = vadd.f32 0.0, %v272
  %274 = vmatmul.f32.gmra.mxu0 %v232
  %v275 = vpop.f32.mrf.mxu0
  %v276 = vadd.f32 0.0, %v275
  %277 = vmatmul.f32.gmra.mxu0 %v235
  %v278 = vpop.f32.mrf.mxu0
  %v279 = vadd.f32 0.0, %v278
  %280 = vdwg.mxu0
  %v281 = vmax.f32 %v191, %v255
  %v282 = vmax.f32 %v192, %v258
  %v283 = vmax.f32 %v193, %v261
  %v284 = vmax.f32 %v194, %v264
  %v285 = vmax.f32 %v195, %v267
  %v286 = vmax.f32 %v196, %v270
  %v287 = vmax.f32 %v197, %v273
  %v288 = vmax.f32 %v198, %v276
  %v289 = vmax.f32 %v199, %v279
  %s290 = scalar_lea.vmem %s0, 216
  %v291 = vld [vmem:[%s290] sm:$0xff]
  %v292 = vld [vmem:[%s290 + $0x8] sm:$0xff]
  %v293 = vld [vmem:[%s290 + $0x10] sm:$0xff]
  %v294 = vld [vmem:[%s290 + $0x18] sm:$0xff]
  %v295 = vld [vmem:[%s290 + $0x20] sm:$0xff]
  %v296 = vld [vmem:[%s290 + $0x28] sm:$0xff]
  %v297 = vld [vmem:[%s290 + $0x30] sm:$0xff]
  %v298 = vld [vmem:[%s290 + $0x38] sm:$0xff]
  %v299 = vld [vmem:[%s290 + $0x40] sm:$0xff]
  %v301 = vsel %vm34, %v291, 0
  %v304 = vsel %vm34, %v292, 0
  %v307 = vsel %vm34, %v293, 0
  %v310 = vsel %vm34, %v294, 0
  %v313 = vsel %vm34, %v295, 0
  %v316 = vsel %vm34, %v296, 0
  %v319 = vsel %vm34, %v297, 0
  %v322 = vsel %vm34, %v298, 0
  %v325 = vsel %vm34, %v299, 0
  %327 = vmatpush.msra.mxu0 0.0
  %328 = vmatpush.msra.mxu0 0.0
  %329 = vmatpush.msra.mxu0 0.0
  %330 = vmatpush.msra.mxu0 0.0
  %331 = vmatpush.msra.mxu0 0.0
  %332 = vmatpush.msra.mxu0 0.0
  %333 = vmatpush.msra.mxu0 0.0
  %334 = vmatpush.msra.mxu0 0.0
  %335 = vmatpush.msra.mxu0 0.0
  %336 = vmatpush.msra.mxu0 0.0
  %337 = vmatpush.msra.mxu0 0.0
  %338 = vmatpush.msra.mxu0 %v64
  %339 = vmatpush.msra.mxu0 %v23
  %340 = vmatpush.msra.mxu0 %v22
  %341 = vmatpush.msra.mxu0 %v21
  %342 = vmatpush.msra.mxu0 %v20
  %343 = vmatmul.f32.gmra.mxu0 %v301
  %v344 = vpop.f32.mrf.mxu0
  %v345 = vadd.f32 0.0, %v344
  %346 = vmatmul.f32.gmra.mxu0 %v304
  %v347 = vpop.f32.mrf.mxu0
  %v348 = vadd.f32 0.0, %v347
  %349 = vmatmul.f32.gmra.mxu0 %v307
  %v350 = vpop.f32.mrf.mxu0
  %v351 = vadd.f32 0.0, %v350
  %352 = vmatmul.f32.gmra.mxu0 %v310
  %v353 = vpop.f32.mrf.mxu0
  %v354 = vadd.f32 0.0, %v353
  %355 = vmatmul.f32.gmra.mxu0 %v313
  %v356 = vpop.f32.mrf.mxu0
  %v357 = vadd.f32 0.0, %v356
  %358 = vmatmul.f32.gmra.mxu0 %v316
  %v359 = vpop.f32.mrf.mxu0
  %v360 = vadd.f32 0.0, %v359
  %361 = vmatmul.f32.gmra.mxu0 %v319
  %v362 = vpop.f32.mrf.mxu0
  %v363 = vadd.f32 0.0, %v362
  %364 = vmatmul.f32.gmra.mxu0 %v322
  %v365 = vpop.f32.mrf.mxu0
  %v366 = vadd.f32 0.0, %v365
  %367 = vmatmul.f32.gmra.mxu0 %v325
  %v368 = vpop.f32.mrf.mxu0
  %v369 = vadd.f32 0.0, %v368
  %370 = vdwg.mxu0
  %v371 = vmax.f32 %v281, %v345
  %v372 = vmax.f32 %v282, %v348
  %v373 = vmax.f32 %v283, %v351
  %v374 = vmax.f32 %v284, %v354
  %v375 = vmax.f32 %v285, %v357
  %v376 = vmax.f32 %v286, %v360
  %v377 = vmax.f32 %v287, %v363
  %v378 = vmax.f32 %v288, %v366
  %v379 = vmax.f32 %v289, %v369
  %v380 = vld [vmem:[%s2] sm:$0x1]
  %v382 = vperm.slane %v380, 0
  %v384 = vadd.f32 %v371, %v382
  %v385 = vadd.f32 %v372, %v382
  %v386 = vadd.f32 %v373, %v382
  %v387 = vadd.f32 %v374, %v382
  %v388 = vadd.f32 %v375, %v382
  %v389 = vadd.f32 %v376, %v382
  %v390 = vadd.f32 %v377, %v382
  %v391 = vadd.f32 %v378, %v382
  %v392 = vadd.f32 %v379, %v382
  %v393 = vmax.f32 %v384, 0.0
  %v394 = vmax.f32 %v385, 0.0
  %v395 = vmax.f32 %v386, 0.0
  %v396 = vmax.f32 %v387, 0.0
  %v397 = vmax.f32 %v388, 0.0
  %v398 = vmax.f32 %v389, 0.0
  %v399 = vmax.f32 %v390, 0.0
  %v400 = vmax.f32 %v391, 0.0
  %v401 = vmax.f32 %v392, 0.0
  %v402 = vld [vmem:[%s4] sm:$0x1]
  %v404 = vperm.slane %v402, 0
  %v406 = vld [vmem:[%s3] sm:$0xff]
  %v407 = vld [vmem:[%s3 + $0x8] sm:$0xff]
  %v408 = vld [vmem:[%s3 + $0x10] sm:$0xff]
  %v409 = vld [vmem:[%s3 + $0x18] sm:$0xff]
  %v410 = vld [vmem:[%s3 + $0x20] sm:$0xff]
  %v411 = vld [vmem:[%s3 + $0x28] sm:$0xff]
  %v412 = vld [vmem:[%s3 + $0x30] sm:$0xff]
  %v413 = vld [vmem:[%s3 + $0x38] sm:$0xff]
  %v414 = vld [vmem:[%s3 + $0x40] sm:$0xff]
  %v415 = vld [vmem:[%s3 + $0x48] sm:$0xff]
  %vm416 = vcmask 654336
  %v418 = vsel %vm416, %v393, 0
  %420 = vmatpush.msra.mxu0 0.0
  %421 = vmatpush.msra.mxu0 0.0
  %422 = vmatpush.msra.mxu0 0.0
  %423 = vmatpush.msra.mxu0 0.0
  %424 = vmatpush.msra.mxu0 0.0
  %425 = vmatpush.msra.mxu0 0.0
  %426 = vmatpush.msra.mxu0 %v415
  %427 = vmatpush.msra.mxu0 %v414
  %428 = vmatpush.msra.mxu0 %v413
  %429 = vmatpush.msra.mxu0 %v412
  %430 = vmatpush.msra.mxu0 %v411
  %431 = vmatpush.msra.mxu0 %v410
  %432 = vmatpush.msra.mxu0 %v409
  %433 = vmatpush.msra.mxu0 %v408
  %434 = vmatpush.msra.mxu0 %v407
  %435 = vmatpush.msra.mxu0 %v406
  %436 = vmatmul.f32.gmra.mxu0 %v418
  %v437 = vpop.f32.mrf.mxu0
  %v438 = vadd.f32 0.0, %v437
  %439 = vdwg.mxu0
  %v440 = vadd.f32 %v404, %v438
  %v441 = vld [vmem:[%s3 + $0x50] sm:$0xff]
  %v442 = vld [vmem:[%s3 + $0x58] sm:$0xff]
  %v443 = vld [vmem:[%s3 + $0x60] sm:$0xff]
  %v444 = vld [vmem:[%s3 + $0x68] sm:$0xff]
  %v445 = vld [vmem:[%s3 + $0x70] sm:$0xff]
  %v446 = vld [vmem:[%s3 + $0x78] sm:$0xff]
  %v447 = vld [vmem:[%s3 + $0x80] sm:$0xff]
  %v448 = vld [vmem:[%s3 + $0x88] sm:$0xff]
  %v449 = vld [vmem:[%s3 + $0x90] sm:$0xff]
  %v450 = vld [vmem:[%s3 + $0x98] sm:$0xff]
  %v452 = vsel %vm416, %v394, 0
  %454 = vmatpush.msra.mxu0 0.0
  %455 = vmatpush.msra.mxu0 0.0
  %456 = vmatpush.msra.mxu0 0.0
  %457 = vmatpush.msra.mxu0 0.0
  %458 = vmatpush.msra.mxu0 0.0
  %459 = vmatpush.msra.mxu0 0.0
  %460 = vmatpush.msra.mxu0 %v450
  %461 = vmatpush.msra.mxu0 %v449
  %462 = vmatpush.msra.mxu0 %v448
  %463 = vmatpush.msra.mxu0 %v447
  %464 = vmatpush.msra.mxu0 %v446
  %465 = vmatpush.msra.mxu0 %v445
  %466 = vmatpush.msra.mxu0 %v444
  %467 = vmatpush.msra.mxu0 %v443
  %468 = vmatpush.msra.mxu0 %v442
  %469 = vmatpush.msra.mxu0 %v441
  %470 = vmatmul.f32.gmra.mxu0 %v452
  %v471 = vpop.f32.mrf.mxu0
  %v472 = vadd.f32 0.0, %v471
  %473 = vdwg.mxu0
  %v474 = vadd.f32 %v440, %v472
  %v475 = vld [vmem:[%s3 + $0xa0] sm:$0xff]
  %v476 = vld [vmem:[%s3 + $0xa8] sm:$0xff]
  %v477 = vld [vmem:[%s3 + $0xb0] sm:$0xff]
  %v478 = vld [vmem:[%s3 + $0xb8] sm:$0xff]
  %v479 = vld [vmem:[%s3 + $0xc0] sm:$0xff]
  %v480 = vld [vmem:[%s3 + $0xc8] sm:$0xff]
  %v481 = vld [vmem:[%s3 + $0xd0] sm:$0xff]
  %v482 = vld [vmem:[%s3 + $0xd8] sm:$0xff]
  %v483 = vld [vmem:[%s3 + $0xe0] sm:$0xff]
  %v484 = vld [vmem:[%s3 + $0xe8] sm:$0xff]
  %v486 = vsel %vm416, %v395, 0
  %488 = vmatpush.msra.mxu0 0.0
  %489 = vmatpush.msra.mxu0 0.0
  %490 = vmatpush.msra.mxu0 0.0
  %491 = vmatpush.msra.mxu0 0.0
  %492 = vmatpush.msra.mxu0 0.0
  %493 = vmatpush.msra.mxu0 0.0
  %494 = vmatpush.msra.mxu0 %v484
  %495 = vmatpush.msra.mxu0 %v483
  %496 = vmatpush.msra.mxu0 %v482
  %497 = vmatpush.msra.mxu0 %v481
  %498 = vmatpush.msra.mxu0 %v480
  %499 = vmatpush.msra.mxu0 %v479
  %500 = vmatpush.msra.mxu0 %v478
  %501 = vmatpush.msra.mxu0 %v477
  %502 = vmatpush.msra.mxu0 %v476
  %503 = vmatpush.msra.mxu0 %v475
  %504 = vmatmul.f32.gmra.mxu0 %v486
  %v505 = vpop.f32.mrf.mxu0
  %v506 = vadd.f32 0.0, %v505
  %507 = vdwg.mxu0
  %v508 = vadd.f32 %v474, %v506
  %v509 = vld [vmem:[%s3 + $0xf0] sm:$0xff]
  %v510 = vld [vmem:[%s3 + $0xf8] sm:$0xff]
  %v511 = vld [vmem:[%s3 + $0x100] sm:$0xff]
  %v512 = vld [vmem:[%s3 + $0x108] sm:$0xff]
  %v513 = vld [vmem:[%s3 + $0x110] sm:$0xff]
  %v514 = vld [vmem:[%s3 + $0x118] sm:$0xff]
  %v515 = vld [vmem:[%s3 + $0x120] sm:$0xff]
  %v516 = vld [vmem:[%s3 + $0x128] sm:$0xff]
  %v517 = vld [vmem:[%s3 + $0x130] sm:$0xff]
  %v518 = vld [vmem:[%s3 + $0x138] sm:$0xff]
  %v520 = vsel %vm416, %v396, 0
  %522 = vmatpush.msra.mxu0 0.0
  %523 = vmatpush.msra.mxu0 0.0
  %524 = vmatpush.msra.mxu0 0.0
  %525 = vmatpush.msra.mxu0 0.0
  %526 = vmatpush.msra.mxu0 0.0
  %527 = vmatpush.msra.mxu0 0.0
  %528 = vmatpush.msra.mxu0 %v518
  %529 = vmatpush.msra.mxu0 %v517
  %530 = vmatpush.msra.mxu0 %v516
  %531 = vmatpush.msra.mxu0 %v515
  %532 = vmatpush.msra.mxu0 %v514
  %533 = vmatpush.msra.mxu0 %v513
  %534 = vmatpush.msra.mxu0 %v512
  %535 = vmatpush.msra.mxu0 %v511
  %536 = vmatpush.msra.mxu0 %v510
  %537 = vmatpush.msra.mxu0 %v509
  %538 = vmatmul.f32.gmra.mxu0 %v520
  %v539 = vpop.f32.mrf.mxu0
  %v540 = vadd.f32 0.0, %v539
  %541 = vdwg.mxu0
  %v542 = vadd.f32 %v508, %v540
  %v543 = vld [vmem:[%s3 + $0x140] sm:$0xff]
  %v544 = vld [vmem:[%s3 + $0x148] sm:$0xff]
  %v545 = vld [vmem:[%s3 + $0x150] sm:$0xff]
  %v546 = vld [vmem:[%s3 + $0x158] sm:$0xff]
  %v547 = vld [vmem:[%s3 + $0x160] sm:$0xff]
  %v548 = vld [vmem:[%s3 + $0x168] sm:$0xff]
  %v549 = vld [vmem:[%s3 + $0x170] sm:$0xff]
  %v550 = vld [vmem:[%s3 + $0x178] sm:$0xff]
  %v551 = vld [vmem:[%s3 + $0x180] sm:$0xff]
  %v552 = vld [vmem:[%s3 + $0x188] sm:$0xff]
  %v554 = vsel %vm416, %v397, 0
  %556 = vmatpush.msra.mxu0 0.0
  %557 = vmatpush.msra.mxu0 0.0
  %558 = vmatpush.msra.mxu0 0.0
  %559 = vmatpush.msra.mxu0 0.0
  %560 = vmatpush.msra.mxu0 0.0
  %561 = vmatpush.msra.mxu0 0.0
  %562 = vmatpush.msra.mxu0 %v552
  %563 = vmatpush.msra.mxu0 %v551
  %564 = vmatpush.msra.mxu0 %v550
  %565 = vmatpush.msra.mxu0 %v549
  %566 = vmatpush.msra.mxu0 %v548
  %567 = vmatpush.msra.mxu0 %v547
  %568 = vmatpush.msra.mxu0 %v546
  %569 = vmatpush.msra.mxu0 %v545
  %570 = vmatpush.msra.mxu0 %v544
  %571 = vmatpush.msra.mxu0 %v543
  %572 = vmatmul.f32.gmra.mxu0 %v554
  %v573 = vpop.f32.mrf.mxu0
  %v574 = vadd.f32 0.0, %v573
  %575 = vdwg.mxu0
  %v576 = vadd.f32 %v542, %v574
  %v577 = vld [vmem:[%s3 + $0x190] sm:$0xff]
  %v578 = vld [vmem:[%s3 + $0x198] sm:$0xff]
  %v579 = vld [vmem:[%s3 + $0x1a0] sm:$0xff]
  %v580 = vld [vmem:[%s3 + $0x1a8] sm:$0xff]
  %v581 = vld [vmem:[%s3 + $0x1b0] sm:$0xff]
  %v582 = vld [vmem:[%s3 + $0x1b8] sm:$0xff]
  %v583 = vld [vmem:[%s3 + $0x1c0] sm:$0xff]
  %v584 = vld [vmem:[%s3 + $0x1c8] sm:$0xff]
  %v585 = vld [vmem:[%s3 + $0x1d0] sm:$0xff]
  %v586 = vld [vmem:[%s3 + $0x1d8] sm:$0xff]
  %v588 = vsel %vm416, %v398, 0
  %590 = vmatpush.msra.mxu0 0.0
  %591 = vmatpush.msra.mxu0 0.0
  %592 = vmatpush.msra.mxu0 0.0
  %593 = vmatpush.msra.mxu0 0.0
  %594 = vmatpush.msra.mxu0 0.0
  %595 = vmatpush.msra.mxu0 0.0
  %596 = vmatpush.msra.mxu0 %v586
  %597 = vmatpush.msra.mxu0 %v585
  %598 = vmatpush.msra.mxu0 %v584
  %599 = vmatpush.msra.mxu0 %v583
  %600 = vmatpush.msra.mxu0 %v582
  %601 = vmatpush.msra.mxu0 %v581
  %602 = vmatpush.msra.mxu0 %v580
  %603 = vmatpush.msra.mxu0 %v579
  %604 = vmatpush.msra.mxu0 %v578
  %605 = vmatpush.msra.mxu0 %v577
  %606 = vmatmul.f32.gmra.mxu0 %v588
  %v607 = vpop.f32.mrf.mxu0
  %v608 = vadd.f32 0.0, %v607
  %609 = vdwg.mxu0
  %v610 = vadd.f32 %v576, %v608
  %v611 = vld [vmem:[%s3 + $0x1e0] sm:$0xff]
  %v612 = vld [vmem:[%s3 + $0x1e8] sm:$0xff]
  %v613 = vld [vmem:[%s3 + $0x1f0] sm:$0xff]
  %v614 = vld [vmem:[%s3 + $0x1f8] sm:$0xff]
  %v615 = vld [vmem:[%s3 + $0x200] sm:$0xff]
  %v616 = vld [vmem:[%s3 + $0x208] sm:$0xff]
  %v617 = vld [vmem:[%s3 + $0x210] sm:$0xff]
  %v618 = vld [vmem:[%s3 + $0x218] sm:$0xff]
  %v619 = vld [vmem:[%s3 + $0x220] sm:$0xff]
  %v620 = vld [vmem:[%s3 + $0x228] sm:$0xff]
  %v622 = vsel %vm416, %v399, 0
  %624 = vmatpush.msra.mxu0 0.0
  %625 = vmatpush.msra.mxu0 0.0
  %626 = vmatpush.msra.mxu0 0.0
  %627 = vmatpush.msra.mxu0 0.0
  %628 = vmatpush.msra.mxu0 0.0
  %629 = vmatpush.msra.mxu0 0.0
  %630 = vmatpush.msra.mxu0 %v620
  %631 = vmatpush.msra.mxu0 %v619
  %632 = vmatpush.msra.mxu0 %v618
  %633 = vmatpush.msra.mxu0 %v617
  %634 = vmatpush.msra.mxu0 %v616
  %635 = vmatpush.msra.mxu0 %v615
  %636 = vmatpush.msra.mxu0 %v614
  %637 = vmatpush.msra.mxu0 %v613
  %638 = vmatpush.msra.mxu0 %v612
  %639 = vmatpush.msra.mxu0 %v611
  %640 = vmatmul.f32.gmra.mxu0 %v622
  %v641 = vpop.f32.mrf.mxu0
  %v642 = vadd.f32 0.0, %v641
  %643 = vdwg.mxu0
  %v644 = vadd.f32 %v610, %v642
  %v645 = vld [vmem:[%s3 + $0x230] sm:$0xff]
  %v646 = vld [vmem:[%s3 + $0x238] sm:$0xff]
  %v647 = vld [vmem:[%s3 + $0x240] sm:$0xff]
  %v648 = vld [vmem:[%s3 + $0x248] sm:$0xff]
  %v649 = vld [vmem:[%s3 + $0x250] sm:$0xff]
  %v650 = vld [vmem:[%s3 + $0x258] sm:$0xff]
  %v651 = vld [vmem:[%s3 + $0x260] sm:$0xff]
  %v652 = vld [vmem:[%s3 + $0x268] sm:$0xff]
  %v653 = vld [vmem:[%s3 + $0x270] sm:$0xff]
  %v654 = vld [vmem:[%s3 + $0x278] sm:$0xff]
  %v656 = vsel %vm416, %v400, 0
  %658 = vmatpush.msra.mxu0 0.0
  %659 = vmatpush.msra.mxu0 0.0
  %660 = vmatpush.msra.mxu0 0.0
  %661 = vmatpush.msra.mxu0 0.0
  %662 = vmatpush.msra.mxu0 0.0
  %663 = vmatpush.msra.mxu0 0.0
  %664 = vmatpush.msra.mxu0 %v654
  %665 = vmatpush.msra.mxu0 %v653
  %666 = vmatpush.msra.mxu0 %v652
  %667 = vmatpush.msra.mxu0 %v651
  %668 = vmatpush.msra.mxu0 %v650
  %669 = vmatpush.msra.mxu0 %v649
  %670 = vmatpush.msra.mxu0 %v648
  %671 = vmatpush.msra.mxu0 %v647
  %672 = vmatpush.msra.mxu0 %v646
  %673 = vmatpush.msra.mxu0 %v645
  %674 = vmatmul.f32.gmra.mxu0 %v656
  %v675 = vpop.f32.mrf.mxu0
  %v676 = vadd.f32 0.0, %v675
  %677 = vdwg.mxu0
  %v678 = vadd.f32 %v644, %v676
  %v679 = vld [vmem:[%s3 + $0x280] sm:$0xff]
  %v680 = vld [vmem:[%s3 + $0x288] sm:$0xff]
  %v681 = vld [vmem:[%s3 + $0x290] sm:$0xff]
  %v682 = vld [vmem:[%s3 + $0x298] sm:$0xff]
  %v683 = vld [vmem:[%s3 + $0x2a0] sm:$0xff]
  %v684 = vld [vmem:[%s3 + $0x2a8] sm:$0xff]
  %v685 = vld [vmem:[%s3 + $0x2b0] sm:$0xff]
  %v686 = vld [vmem:[%s3 + $0x2b8] sm:$0xff]
  %v687 = vld [vmem:[%s3 + $0x2c0] sm:$0xff]
  %v688 = vld [vmem:[%s3 + $0x2c8] sm:$0xff]
  %v690 = vsel %vm416, %v401, 0
  %692 = vmatpush.msra.mxu0 0.0
  %693 = vmatpush.msra.mxu0 0.0
  %694 = vmatpush.msra.mxu0 0.0
  %695 = vmatpush.msra.mxu0 0.0
  %696 = vmatpush.msra.mxu0 0.0
  %697 = vmatpush.msra.mxu0 0.0
  %698 = vmatpush.msra.mxu0 %v688
  %699 = vmatpush.msra.mxu0 %v687
  %700 = vmatpush.msra.mxu0 %v686
  %701 = vmatpush.msra.mxu0 %v685
  %702 = vmatpush.msra.mxu0 %v684
  %703 = vmatpush.msra.mxu0 %v683
  %704 = vmatpush.msra.mxu0 %v682
  %705 = vmatpush.msra.mxu0 %v681
  %706 = vmatpush.msra.mxu0 %v680
  %707 = vmatpush.msra.mxu0 %v679
  %708 = vmatmul.f32.gmra.mxu0 %v690
  %v709 = vpop.f32.mrf.mxu0
  %v710 = vadd.f32 0.0, %v709
  %711 = vdwg.mxu0
  %v712 = vadd.f32 %v678, %v710
  %713 = vst [vmem:[%s5] sm:$0xff] %v712
  // Predicated region
  $region22: #{cnn2d_forward.1} parent=0 // pred_check
    _
  $region23: #{cnn2d_forward.1} parent=0 // pred_check_branch
    %715 = sbr.rel (0) target = $region25
  $region24: #{cnn2d_forward.1} parent=0 // pred_region
    _
  $region25: #{cnn2d_forward.1} parent=0 // pred_fallthru
    _
  // Predicated region
  $region26: #{cnn2d_forward.1} parent=0 // pred_check
    _
  $region27: #{cnn2d_forward.1} parent=0 // pred_check_branch
    %717 = sbr.rel (0) target = $region29
  $region28: #{cnn2d_forward.1} parent=0 // pred_region
    _
  $region29: #{cnn2d_forward.1} parent=0 // pred_fallthru
    _

</llo_original>
